<compile_context>
chip_gen: v7x
topology: tpu7x:2x2x1
jax: 0.10.0
libtpu: 0.0.40
codegen_flags: <defaults>
</compile_context>

<pallas_src>
import functools

import jax
import jax.numpy as jnp
from jax.experimental import pallas as pl
from jax.experimental.pallas import tpu as pltpu

_FUSED_MAX_BATCH = 4096   # rows handled by the single fused grid point
_BATCH_TILE = 2048        # nominal rows per grid step on the (rare) tiled path


def _round_up(n, m):
    return ((n + m - 1) // m) * m


def _net_kernel(x_ref, p_ref, o_ref, *, n_state, mid, n_action, offs):
    """Fully fused MLP + softmax on one batch tile.

    p_ref is the packed parameter slab; `offs` are the static row offsets of
    (w1, b1, w2, b2, w3, b3).  Each piece starts on an 8-row boundary so the
    static slices below never straddle a (8,128) tile.
    """
    o_w1, o_b1, o_w2, o_b2, o_w3, o_b3 = offs
    x = x_ref[...]

    w1 = p_ref[o_w1:o_w1 + n_state, :mid]
    b1 = p_ref[o_b1:o_b1 + 1, :mid]
    w2 = p_ref[o_w2:o_w2 + mid, :mid]
    b2 = p_ref[o_b2:o_b2 + 1, :mid]
    w3 = p_ref[o_w3:o_w3 + mid, :n_action]
    b3 = p_ref[o_b3:o_b3 + 1, :n_action]

    h1 = jnp.maximum(jnp.dot(x, w1, preferred_element_type=jnp.float32) + b1, 0.0)
    h2 = jnp.maximum(jnp.dot(h1, w2, preferred_element_type=jnp.float32) + b2, 0.0)
    logits = jnp.dot(h2, w3, preferred_element_type=jnp.float32) + b3

    # Numerically stable softmax over the action (last / lane) axis.
    m = jnp.max(logits, axis=-1, keepdims=True)
    e = jnp.exp(logits - m)
    denom = jnp.sum(e, axis=-1, keepdims=True)
    o_ref[...] = (e / denom).astype(o_ref.dtype)


def prepare_params(params):
    """One-time conversion of PyTorch-convention params into a single slab.

    Input (PyTorch Linear convention):
        w1: (mid, n_state)  b1: (mid,)
        w2: (mid, mid)      b2: (mid,)
        w3: (n_action, mid) b3: (n_action,)
    Output:
        slab: (rows, max(mid, n_action)) f32 array; every piece is stored in
              (in, out) layout, padded to a multiple of 8 rows, concatenated.
        meta: (n_state, mid, n_action, row_offsets) -- static Python ints.
    """
    w1, b1 = params["w1"], params["b1"]
    w2, b2 = params["w2"], params["b2"]
    w3, b3 = params["w3"], params["b3"]
    mid, n_state = w1.shape
    n_action = w3.shape[0]
    cols = max(mid, n_action)

    pieces = [
        jnp.asarray(w1.T, jnp.float32),                      # (n_state, mid)
        jnp.asarray(b1, jnp.float32).reshape(1, mid),        # (1, mid)
        jnp.asarray(w2.T, jnp.float32),                      # (mid, mid)
        jnp.asarray(b2, jnp.float32).reshape(1, mid),        # (1, mid)
        jnp.asarray(w3.T, jnp.float32),                      # (mid, n_action)
        jnp.asarray(b3, jnp.float32).reshape(1, n_action),   # (1, n_action)
    ]

    offs = []
    padded = []
    row = 0
    for p in pieces:
        r, c = p.shape
        pr = _round_up(r, 8)
        offs.append(row)
        padded.append(jnp.pad(p, ((0, pr - r), (0, cols - c))))
        row += pr
    slab = jnp.concatenate(padded, axis=0)
    meta = (n_state, mid, n_action, tuple(offs))
    return slab, meta


def net_forward(x, slab, meta, *, fused_max=_FUSED_MAX_BATCH,
                batch_tile=_BATCH_TILE):
    """x: (B, n_state) f32.  slab/meta: from prepare_params()."""
    n_state, mid, n_action, offs = meta
    del mid  # carried inside meta/kernel only
    B = x.shape[0]
    slab_rows, slab_cols = slab.shape

    kernel = functools.partial(
        _net_kernel, n_state=n_state, mid=meta[1], n_action=n_action, offs=offs)

    slab_spec = pl.BlockSpec((slab_rows, slab_cols), lambda *a: (0, 0))
    out_shape = jax.ShapeDtypeStruct((B, n_action), jnp.float32)

    if B <= fused_max:
        # Single grid point, everything resident in VMEM, 2 input DMAs total.
        return pl.pallas_call(
            kernel,
            out_shape=out_shape,
            in_specs=[pl.BlockSpec((B, n_state), lambda *a: (0, 0)), slab_spec],
            out_specs=pl.BlockSpec((B, n_action), lambda *a: (0, 0)),
        )(x, slab)

    # Huge-rollout path: tile the batch axis.  No pad / slice -- the final
    # block is clipped (masked writes; all math is row-wise so garbage rows in
    # the partial tile never contaminate valid rows).  Even step count so the
    # parallel grid balances across v7x's 2 TensorCores.
    n_steps = pl.cdiv(B, batch_tile)
    n_steps += n_steps % 2
    tb = _round_up(pl.cdiv(B, n_steps), 8)
    grid = (pl.cdiv(B, tb),)
    return pl.pallas_call(
        kernel,
        out_shape=out_shape,
        grid=grid,
        in_specs=[pl.BlockSpec((tb, n_state), lambda i: (i, 0)), slab_spec],
        out_specs=pl.BlockSpec((tb, n_action), lambda i: (i, 0)),
        compiler_params=pltpu.CompilerParams(
            dimension_semantics=("parallel",)),
    )(x, slab)


def init_params(key, n_state, n_action, mid):
    """Matches Net.init_weights(): weights ~ N(0, 0.2), biases = 0."""
    k1, k2, k3 = jax.random.split(key, 3)
    return {
        "w1": 0.2 * jax.random.normal(k1, (mid, n_state), jnp.float32),
        "b1": jnp.zeros((mid,), jnp.float32),
        "w2": 0.2 * jax.random.normal(k2, (mid, mid), jnp.float32),
        "b2": jnp.zeros((mid,), jnp.float32),
        "w3": 0.2 * jax.random.normal(k3, (n_action, mid), jnp.float32),
        "b3": jnp.zeros((n_action,), jnp.float32),
    }


def _reference(x, params):
    h1 = jnp.maximum(x @ params["w1"].T + params["b1"], 0.0)
    h2 = jnp.maximum(h1 @ params["w2"].T + params["b2"], 0.0)
    return jax.nn.softmax(h2 @ params["w3"].T + params["b3"], axis=-1)


if __name__ == "__main__":
    n_state, n_action, mid = 4, 2, 32
    batch = 8

    key = jax.random.PRNGKey(0)
    pkey, xkey, xkey2 = jax.random.split(key, 3)
    params = init_params(pkey, n_state, n_action, mid)
    slab, meta = prepare_params(params)   # one-time layout / packing

    fwd = jax.jit(net_forward, static_argnums=(2,),
                  static_argnames=("fused_max", "batch_tile"))

    # --- small-batch (per-step RL inference) fused path ---
    x = jax.random.normal(xkey, (batch, n_state), jnp.float32)
    out = jax.block_until_ready(fwd(x, slab, meta))
    ref = _reference(x, params)
    assert out.shape == (batch, n_action)
    assert jnp.allclose(jnp.sum(out, axis=-1), 1.0, atol=1e-5)
    assert jnp.allclose(out, ref, atol=1e-4, rtol=1e-4)

    # --- rollout batch (B=1040): now stays on the fused path (no pad/slice) ---
    big_batch = 1040
    xb = jax.random.normal(xkey2, (big_batch, n_state), jnp.float32)
    outb = jax.block_until_ready(fwd(xb, slab, meta))
    refb = _reference(xb, params)
    assert outb.shape == (big_batch, n_action)
    assert jnp.allclose(jnp.sum(outb, axis=-1), 1.0, atol=1e-5)
    assert jnp.allclose(outb, refb, atol=1e-4, rtol=1e-4)

    # --- force the tiled path (clipped final block, even step count) so the
    #     non-multiple-of-tile case stays unit-tested ---
    outt = jax.block_until_ready(
        fwd(xb, slab, meta, fused_max=256, batch_tile=256))
    assert outt.shape == (big_batch, n_action)
    assert jnp.allclose(jnp.sum(outt, axis=-1), 1.0, atol=1e-5)
    assert jnp.allclose(outt, refb, atol=1e-4, rtol=1e-4)

    print("KERNEL_OK")
</pallas_src>

<mosaic_0001>
module attributes {stable_mosaic.version = 11 : i64} {
  func.func @_net_kernel(%arg0: memref<8x4xf32, #tpu.memory_space<vmem>>, %arg1: memref<96x32xf32, #tpu.memory_space<vmem>>, %arg2: memref<8x2xf32, #tpu.memory_space<vmem>>) attributes {dimension_semantics = [], scalar_prefetch = 0 : i64, scratch_operands = 0 : i64, tpu.core_type = #tpu.core_type<tc>} {
    %c0 = arith.constant 0 : index
    %c0_0 = arith.constant 0 : index
    %0 = vector.load %arg0[%c0, %c0_0] : memref<8x4xf32, #tpu.memory_space<vmem>>, vector<8x4xf32>
    %c0_1 = arith.constant 0 : index
    %c0_2 = arith.constant 0 : index
    %1 = vector.load %arg1[%c0_1, %c0_2] : memref<96x32xf32, #tpu.memory_space<vmem>>, vector<4x32xf32>
    %c8 = arith.constant 8 : index
    %c0_3 = arith.constant 0 : index
    %2 = vector.load %arg1[%c8, %c0_3] : memref<96x32xf32, #tpu.memory_space<vmem>>, vector<1x32xf32>
    %c16 = arith.constant 16 : index
    %c0_4 = arith.constant 0 : index
    %3 = vector.load %arg1[%c16, %c0_4] : memref<96x32xf32, #tpu.memory_space<vmem>>, vector<32x32xf32>
    %c48 = arith.constant 48 : index
    %c0_5 = arith.constant 0 : index
    %4 = vector.load %arg1[%c48, %c0_5] : memref<96x32xf32, #tpu.memory_space<vmem>>, vector<1x32xf32>
    %c56 = arith.constant 56 : index
    %c0_6 = arith.constant 0 : index
    %5 = vector.load %arg1[%c56, %c0_6] : memref<96x32xf32, #tpu.memory_space<vmem>>, vector<32x2xf32>
    %c88 = arith.constant 88 : index
    %c0_7 = arith.constant 0 : index
    %6 = vector.load %arg1[%c88, %c0_7] : memref<96x32xf32, #tpu.memory_space<vmem>>, vector<1x2xf32>
    %cst = arith.constant dense<0.000000e+00> : vector<8x32xf32>
    %7 = tpu.matmul %0, %1, %cst {dimension_numbers = #tpu.dot_dimension_numbers<[1], [0], [0], [1], [0, 0, 1, 1], [], []>} : vector<8x4xf32>, vector<4x32xf32>, vector<8x32xf32> -> vector<8x32xf32>
    %8 = vector.broadcast %2 : vector<1x32xf32> to vector<8x32xf32>
    %9 = arith.addf %7, %8 : vector<8x32xf32>
    %cst_8 = arith.constant 0.000000e+00 : f32
    %10 = vector.broadcast %cst_8 : f32 to vector<8x32xf32>
    %11 = arith.maximumf %9, %10 : vector<8x32xf32>
    %cst_9 = arith.constant dense<0.000000e+00> : vector<8x32xf32>
    %12 = tpu.matmul %11, %3, %cst_9 {dimension_numbers = #tpu.dot_dimension_numbers<[1], [0], [0], [1], [0, 0, 1, 1], [], []>} : vector<8x32xf32>, vector<32x32xf32>, vector<8x32xf32> -> vector<8x32xf32>
    %13 = vector.broadcast %4 : vector<1x32xf32> to vector<8x32xf32>
    %14 = arith.addf %12, %13 : vector<8x32xf32>
    %cst_10 = arith.constant 0.000000e+00 : f32
    %15 = vector.broadcast %cst_10 : f32 to vector<8x32xf32>
    %16 = arith.maximumf %14, %15 : vector<8x32xf32>
    %cst_11 = arith.constant dense<0.000000e+00> : vector<8x2xf32>
    %17 = tpu.matmul %16, %5, %cst_11 {dimension_numbers = #tpu.dot_dimension_numbers<[1], [0], [0], [1], [0, 0, 1, 1], [], []>} : vector<8x32xf32>, vector<32x2xf32>, vector<8x2xf32> -> vector<8x2xf32>
    %18 = vector.broadcast %6 : vector<1x2xf32> to vector<8x2xf32>
    %19 = arith.addf %17, %18 : vector<8x2xf32>
    %cst_12 = arith.constant dense<0xFF800000> : vector<8xf32>
    %20 = vector.multi_reduction <maximumf>, %19, %cst_12 [1] : vector<8x2xf32> to vector<8xf32>
    %21 = vector.shape_cast %20 : vector<8xf32> to vector<8x1xf32>
    %22 = vector.broadcast %21 : vector<8x1xf32> to vector<8x2xf32>
    %23 = arith.subf %19, %22 : vector<8x2xf32>
    %24 = math.exp %23 : vector<8x2xf32>
    %cst_13 = arith.constant dense<0.000000e+00> : vector<8xf32>
    %25 = vector.multi_reduction <add>, %24, %cst_13 [1] : vector<8x2xf32> to vector<8xf32>
    %26 = vector.shape_cast %25 : vector<8xf32> to vector<8x1xf32>
    %27 = vector.broadcast %26 : vector<8x1xf32> to vector<8x2xf32>
    %28 = arith.divf %24, %27 : vector<8x2xf32>
    %c0_14 = arith.constant 0 : index
    %c0_15 = arith.constant 0 : index
    %29 = vector.load %arg2[%c0_14, %c0_15] : memref<8x2xf32, #tpu.memory_space<vmem>>, vector<8x2xf32>
    tpu.vector_store %arg2[%c0_14, %c0_15], %28 {strides = array<i32>} : memref<8x2xf32, #tpu.memory_space<vmem>>, vector<8x2xf32>,
    return
  }
}

</mosaic_0001>

<llo_original>
// kernel: net_forward.1
$region0: #{net_forward.1}
  #allocation0 [shape = 'u32[]', space=smem, size = 0x4, offset = 0x4, fixed_abs, tag = 'smem constant byte address 0x4 - core index']
  #allocation1 [shape = 'u32[144,128]{1,0:T(1,128)}', space=vmem, size = 0x12000, scoped, tag = 'internal scratch']
  %s0 = inlined_call_operand.vmem [shape: f32[8,4], index: 0, kind: input, shape index: {}]
  %s1 = inlined_call_operand.vmem [shape: f32[96,32], index: 1, kind: input, shape index: {}]
  %s2 = inlined_call_operand.vmem [shape: f32[8,2], index: 2, kind: output, shape index: {}]
  %s3 = sld [smem:[#allocation0]]
  $region18: #{net_forward.1} parent=0
    _
  %s5 = ssub.s32 1, %s3
  %s6 = scalar_select 0, %s5, %s3
  // Predicated region
  $region2: #{net_forward.1} parent=0 // pred_check
    _
  $region3: #{net_forward.1} parent=0 // pred_check_branch
    %8 = sbr.rel (0) target = $region5
  $region4: #{net_forward.1} parent=0 // pred_region
    _
  $region5: #{net_forward.1} parent=0 // pred_fallthru
    _
  // Predicated region
  $region6: #{net_forward.1} parent=0 // pred_check
    _
  $region7: #{net_forward.1} parent=0 // pred_check_branch
    %10 = sbr.rel (0) target = $region9
  $region8: #{net_forward.1} parent=0 // pred_region
    _
  $region9: #{net_forward.1} parent=0 // pred_fallthru
    _
  %v11 = vld [vmem:[%s0] sm:$0xff]
  %v12 = vld [vmem:[%s1] sm:$0xf]
  %v13 = vld [vmem:[%s1 + $0x8] sm:$0x1]
  %v14 = vld [vmem:[%s1 + $0x10] sm:$0xff]
  %v15 = vld [vmem:[%s1 + $0x18] sm:$0xff]
  %v16 = vld [vmem:[%s1 + $0x20] sm:$0xff]
  %v17 = vld [vmem:[%s1 + $0x28] sm:$0xff]
  %v18 = vld [vmem:[%s1 + $0x30] sm:$0x1]
  %v19 = vld [vmem:[%s1 + $0x38] sm:$0xff]
  %v20 = vld [vmem:[%s1 + $0x40] sm:$0xff]
  %v21 = vld [vmem:[%s1 + $0x48] sm:$0xff]
  %v22 = vld [vmem:[%s1 + $0x50] sm:$0xff]
  %v23 = vld [vmem:[%s1 + $0x58] sm:$0x1]
  %v24 = vlaneseq
  %v25 = vshrl.u32 %v24, 7
  %v26 = vsub.s32 0, %v25
  %v27 = vrot.slane %v13, %v26
  %vm28 = vcmask 31744
  %v30 = vsel %vm28, %v11, 0
  %vm32 = vcmask 1043456
  %v34 = vsel %vm32, %v12, 0
  %36 = vmatprep.subr.mxu0 0.0
  %37 = vmatpush1.msra.mxu0 %v34
  %38 = vmatprep.subr.mxu0 0.0
  %39 = vmatpush1.msra.mxu0 0.0
  %40 = vmatprep.subr.mxu0 0.0
  %41 = vmatpush1.msra.mxu0 0.0
  %42 = vmatprep.subr.mxu0 0.0
  %43 = vmatpush1.msra.mxu0 0.0
  %44 = vmatprep.subr.mxu0 0.0
  %45 = vmatpush1.msra.mxu0 0.0
  %46 = vmatprep.subr.mxu0 0.0
  %47 = vmatpush1.msra.mxu0 0.0
  %48 = vmatprep.subr.mxu0 0.0
  %49 = vmatpush1.msra.mxu0 0.0
  %50 = vmatprep.subr.mxu0 0.0
  %51 = vmatpush1.msra.mxu0 0.0
  %52 = vmatprep.subr.mxu0 0.0
  %53 = vmatpush1.msra.mxu0 0.0
  %54 = vmatprep.subr.mxu0 0.0
  %55 = vmatpush1.msra.mxu0 0.0
  %56 = vmatprep.subr.mxu0 0.0
  %57 = vmatpush1.msra.mxu0 0.0
  %58 = vmatprep.subr.mxu0 0.0
  %59 = vmatpush1.msra.mxu0 0.0
  %60 = vmatprep.subr.mxu0 0.0
  %61 = vmatpush1.msra.mxu0 0.0
  %62 = vmatprep.subr.mxu0 0.0
  %63 = vmatpush1.msra.mxu0 0.0
  %64 = vmatprep.subr.mxu0 0.0
  %65 = vmatpush1.msra.mxu0 0.0
  %66 = vmatprep.subr.mxu0 0.0
  %67 = vmatpush1.msra.mxu0 0.0
  %68 = vmatprep.subr.mxu0 0.0
  %69 = vmatpush1.msra.mxu0 0.0
  %70 = vmatprep.subr.mxu0 0.0
  %71 = vmatpush1.msra.mxu0 0.0
  %72 = vmatprep.subr.mxu0 0.0
  %73 = vmatpush1.msra.mxu0 0.0
  %74 = vmatprep.subr.mxu0 0.0
  %75 = vmatpush1.msra.mxu0 0.0
  %76 = vmatprep.subr.mxu0 0.0
  %77 = vmatpush1.msra.mxu0 0.0
  %78 = vmatprep.subr.mxu0 0.0
  %79 = vmatpush1.msra.mxu0 0.0
  %80 = vmatprep.subr.mxu0 0.0
  %81 = vmatpush1.msra.mxu0 0.0
  %82 = vmatprep.subr.mxu0 0.0
  %83 = vmatpush1.msra.mxu0 0.0
  %84 = vmatprep.subr.mxu0 0.0
  %85 = vmatpush1.msra.mxu0 0.0
  %86 = vmatprep.subr.mxu0 0.0
  %87 = vmatpush1.msra.mxu0 0.0
  %88 = vmatprep.subr.mxu0 0.0
  %89 = vmatpush1.msra.mxu0 0.0
  %90 = vmatprep.subr.mxu0 0.0
  %91 = vmatpush1.msra.mxu0 0.0
  %92 = vmatprep.subr.mxu0 0.0
  %93 = vmatpush1.msra.mxu0 0.0
  %94 = vmatprep.subr.mxu0 0.0
  %95 = vmatpush1.msra.mxu0 0.0
  %96 = vmatprep.subr.mxu0 0.0
  %97 = vmatpush1.msra.mxu0 0.0
  %98 = vmatprep.subr.mxu0 0.0
  %99 = vmatpush1.msra.mxu0 0.0
  %100 = vmatprep.mubr.f32.mxu0 0.0
  %101 = vmatmul.mubr.f32.gmra.mrb[0].mxu0 %v30
  %v102 = vpop.f32.mrb[0].mxu0
  %v103 = vadd.f32 %v27, %v102
  %v104 = vpop.f32.mrb[0].mxu0
  %105 = vdwg.mxu0
  %v106 = vmax.f32 %v103, 0.0
  %v107 = vlaneseq
  %v108 = vshrl.u32 %v107, 7
  %v109 = vsub.s32 0, %v108
  %v110 = vrot.slane %v18, %v109
  %vm111 = vcmask 261120
  %v113 = vsel %vm111, %v106, 0
  %115 = vmatprep.subr.mxu0 0.0
  %116 = vmatpush1.msra.mxu0 %v14
  %117 = vmatprep.subr.mxu0 0.0
  %118 = vmatpush1.msra.mxu0 %v15
  %119 = vmatprep.subr.mxu0 0.0
  %120 = vmatpush1.msra.mxu0 %v16
  %121 = vmatprep.subr.mxu0 0.0
  %122 = vmatpush1.msra.mxu0 %v17
  %123 = vmatprep.subr.mxu0 0.0
  %124 = vmatpush1.msra.mxu0 0.0
  %125 = vmatprep.subr.mxu0 0.0
  %126 = vmatpush1.msra.mxu0 0.0
  %127 = vmatprep.subr.mxu0 0.0
  %128 = vmatpush1.msra.mxu0 0.0
  %129 = vmatprep.subr.mxu0 0.0
  %130 = vmatpush1.msra.mxu0 0.0
  %131 = vmatprep.subr.mxu0 0.0
  %132 = vmatpush1.msra.mxu0 0.0
  %133 = vmatprep.subr.mxu0 0.0
  %134 = vmatpush1.msra.mxu0 0.0
  %135 = vmatprep.subr.mxu0 0.0
  %136 = vmatpush1.msra.mxu0 0.0
  %137 = vmatprep.subr.mxu0 0.0
  %138 = vmatpush1.msra.mxu0 0.0
  %139 = vmatprep.subr.mxu0 0.0
  %140 = vmatpush1.msra.mxu0 0.0
  %141 = vmatprep.subr.mxu0 0.0
  %142 = vmatpush1.msra.mxu0 0.0
  %143 = vmatprep.subr.mxu0 0.0
  %144 = vmatpush1.msra.mxu0 0.0
  %145 = vmatprep.subr.mxu0 0.0
  %146 = vmatpush1.msra.mxu0 0.0
  %147 = vmatprep.subr.mxu0 0.0
  %148 = vmatpush1.msra.mxu0 0.0
  %149 = vmatprep.subr.mxu0 0.0
  %150 = vmatpush1.msra.mxu0 0.0
  %151 = vmatprep.subr.mxu0 0.0
  %152 = vmatpush1.msra.mxu0 0.0
  %153 = vmatprep.subr.mxu0 0.0
  %154 = vmatpush1.msra.mxu0 0.0
  %155 = vmatprep.subr.mxu0 0.0
  %156 = vmatpush1.msra.mxu0 0.0
  %157 = vmatprep.subr.mxu0 0.0
  %158 = vmatpush1.msra.mxu0 0.0
  %159 = vmatprep.subr.mxu0 0.0
  %160 = vmatpush1.msra.mxu0 0.0
  %161 = vmatprep.subr.mxu0 0.0
  %162 = vmatpush1.msra.mxu0 0.0
  %163 = vmatprep.subr.mxu0 0.0
  %164 = vmatpush1.msra.mxu0 0.0
  %165 = vmatprep.subr.mxu0 0.0
  %166 = vmatpush1.msra.mxu0 0.0
  %167 = vmatprep.subr.mxu0 0.0
  %168 = vmatpush1.msra.mxu0 0.0
  %169 = vmatprep.subr.mxu0 0.0
  %170 = vmatpush1.msra.mxu0 0.0
  %171 = vmatprep.subr.mxu0 0.0
  %172 = vmatpush1.msra.mxu0 0.0
  %173 = vmatprep.subr.mxu0 0.0
  %174 = vmatpush1.msra.mxu0 0.0
  %175 = vmatprep.subr.mxu0 0.0
  %176 = vmatpush1.msra.mxu0 0.0
  %177 = vmatprep.subr.mxu0 0.0
  %178 = vmatpush1.msra.mxu0 0.0
  %179 = vmatprep.mubr.f32.mxu0 0.0
  %180 = vmatmul.mubr.f32.gmra.mrb[0].mxu0 %v113
  %v181 = vpop.f32.mrb[0].mxu0
  %v182 = vadd.f32 %v110, %v181
  %v183 = vpop.f32.mrb[0].mxu0
  %184 = vdwg.mxu0
  %v185 = vmax.f32 %v182, 0.0
  %v186 = vlaneseq
  %v187 = vshrl.u32 %v186, 7
  %v188 = vsub.s32 0, %v187
  %v189 = vrot.slane %v23, %v188
  %v191 = vsel %vm111, %v185, 0
  %193 = vmatprep.subr.mxu0 0.0
  %194 = vmatpush1.msra.mxu0 %v19
  %195 = vmatprep.subr.mxu0 0.0
  %196 = vmatpush1.msra.mxu0 %v20
  %197 = vmatprep.subr.mxu0 0.0
  %198 = vmatpush1.msra.mxu0 %v21
  %199 = vmatprep.subr.mxu0 0.0
  %200 = vmatpush1.msra.mxu0 %v22
  %201 = vmatprep.subr.mxu0 0.0
  %202 = vmatpush1.msra.mxu0 0.0
  %203 = vmatprep.subr.mxu0 0.0
  %204 = vmatpush1.msra.mxu0 0.0
  %205 = vmatprep.subr.mxu0 0.0
  %206 = vmatpush1.msra.mxu0 0.0
  %207 = vmatprep.subr.mxu0 0.0
  %208 = vmatpush1.msra.mxu0 0.0
  %209 = vmatprep.subr.mxu0 0.0
  %210 = vmatpush1.msra.mxu0 0.0
  %211 = vmatprep.subr.mxu0 0.0
  %212 = vmatpush1.msra.mxu0 0.0
  %213 = vmatprep.subr.mxu0 0.0
  %214 = vmatpush1.msra.mxu0 0.0
  %215 = vmatprep.subr.mxu0 0.0
  %216 = vmatpush1.msra.mxu0 0.0
  %217 = vmatprep.subr.mxu0 0.0
  %218 = vmatpush1.msra.mxu0 0.0
  %219 = vmatprep.subr.mxu0 0.0
  %220 = vmatpush1.msra.mxu0 0.0
  %221 = vmatprep.subr.mxu0 0.0
  %222 = vmatpush1.msra.mxu0 0.0
  %223 = vmatprep.subr.mxu0 0.0
  %224 = vmatpush1.msra.mxu0 0.0
  %225 = vmatprep.subr.mxu0 0.0
  %226 = vmatpush1.msra.mxu0 0.0
  %227 = vmatprep.subr.mxu0 0.0
  %228 = vmatpush1.msra.mxu0 0.0
  %229 = vmatprep.subr.mxu0 0.0
  %230 = vmatpush1.msra.mxu0 0.0
  %231 = vmatprep.subr.mxu0 0.0
  %232 = vmatpush1.msra.mxu0 0.0
  %233 = vmatprep.subr.mxu0 0.0
  %234 = vmatpush1.msra.mxu0 0.0
  %235 = vmatprep.subr.mxu0 0.0
  %236 = vmatpush1.msra.mxu0 0.0
  %237 = vmatprep.subr.mxu0 0.0
  %238 = vmatpush1.msra.mxu0 0.0
  %239 = vmatprep.subr.mxu0 0.0
  %240 = vmatpush1.msra.mxu0 0.0
  %241 = vmatprep.subr.mxu0 0.0
  %242 = vmatpush1.msra.mxu0 0.0
  %243 = vmatprep.subr.mxu0 0.0
  %244 = vmatpush1.msra.mxu0 0.0
  %245 = vmatprep.subr.mxu0 0.0
  %246 = vmatpush1.msra.mxu0 0.0
  %247 = vmatprep.subr.mxu0 0.0
  %248 = vmatpush1.msra.mxu0 0.0
  %249 = vmatprep.subr.mxu0 0.0
  %250 = vmatpush1.msra.mxu0 0.0
  %251 = vmatprep.subr.mxu0 0.0
  %252 = vmatpush1.msra.mxu0 0.0
  %253 = vmatprep.subr.mxu0 0.0
  %254 = vmatpush1.msra.mxu0 0.0
  %255 = vmatprep.subr.mxu0 0.0
  %256 = vmatpush1.msra.mxu0 0.0
  %257 = vmatprep.mubr.f32.mxu0 0.0
  %258 = vmatmul.mubr.f32.gmra.mrb[0].mxu0 %v191
  %v259 = vpop.f32.mrb[0].mxu0
  %v260 = vadd.f32 %v189, %v259
  %v261 = vpop.f32.mrb[0].mxu0
  %262 = vdwg.mxu0
  %vm263 = vcmask 15360
  %v264 = vsel %vm263, %v260, -inf
  %265 = vmax.xlane.f32.xlu0 %v264
  %v266 = vpop.xlane.xlu0 %265
  %v267 = vsub.f32 %v260, %v266
  %v268 = vmul.f32 %v267, 1.442695
  %v269 = vpow.pop %v268
  %v270 = vsel %vm263, %v269, 0.0
  %271 = vadd.xlane.f32.xlu0 %v270
  %v272 = vpop.xlane.xlu0 %271
  %v273 = vrcp.pop %v272
  %v274 = vmul.f32 %v269, %v273
  %275 = vst.msk [vmem:[%s2] sm:$0xff] %vm263, %v274
  // Predicated region
  $region10: #{net_forward.1} parent=0 // pred_check
    _
  $region11: #{net_forward.1} parent=0 // pred_check_branch
    %277 = sbr.rel (0) target = $region13
  $region12: #{net_forward.1} parent=0 // pred_region
    _
  $region13: #{net_forward.1} parent=0 // pred_fallthru
    _
  // Predicated region
  $region14: #{net_forward.1} parent=0 // pred_check
    _
  $region15: #{net_forward.1} parent=0 // pred_check_branch
    %279 = sbr.rel (0) target = $region17
  $region16: #{net_forward.1} parent=0 // pred_region
    _
  $region17: #{net_forward.1} parent=0 // pred_fallthru
    _

</llo_original>
